<compile_context>
chip_gen: v7x
topology: tpu7x:2x2x1
jax: 0.10.0
libtpu: 0.0.40
codegen_flags: <defaults>
</compile_context>

<pallas_src>
import numpy as np

import jax
import jax.numpy as jnp
from jax import lax
from jax.experimental import pallas as pl
from jax.experimental.pallas import tpu as pltpu


# ---------------------------------------------------------------------------
# helpers
# ---------------------------------------------------------------------------
def _round_up(x, m):
    return ((x + m - 1) // m) * m


def _default_vmem_limit_bytes():
    # Leave headroom below physical VMEM (64 MiB/core on v7x, 128 MiB on v5e/v6e).
    cap = None
    try:
        cap = getattr(pltpu.get_tpu_info(), "vmem_capacity_bytes", None)
    except Exception:
        cap = None
    if not cap:
        cap = 64 * 1024 * 1024  # conservative default: v7x physical VMEM per TensorCore
    return int(min(96 * 1024 * 1024, (3 * cap) // 4))


def _pick_tile_rows(n_cols, itemsize, vmem_limit_bytes):
    """Row-tile size for the adjacency stream: >= ~1 MiB per tile DMA (amortizes per-step
    overhead), double-buffered working set well under the VMEM limit, multiple of 8."""
    row_bytes = max(1, n_cols * itemsize)
    target = (1 << 20) // row_bytes
    budget = (vmem_limit_bytes // 4) // row_bytes
    tile = min(1024, max(target, 8), max(budget, 8))
    return max(8, (tile // 8) * 8)


# ---------------------------------------------------------------------------
# Kernel 1a: support = X @ W   (hoisted out of the adjacency-streaming kernel)
# ---------------------------------------------------------------------------
def _support_kernel(x_ref, w_ref, o_ref):
    o_ref[...] = jnp.dot(x_ref[...], w_ref[...], preferred_element_type=jnp.float32)


def compute_support(x, w, *, tile_rows=256):
    n, c = x.shape
    tile = min(_round_up(n, 8), _round_up(tile_rows, 8))
    n_pad = pl.cdiv(n, tile) * tile
    x_p = x if n_pad == n else jnp.pad(x, ((0, n_pad - n), (0, 0)))
    out = pl.pallas_call(
        _support_kernel,
        out_shape=jax.ShapeDtypeStruct((n_pad, 1), jnp.float32),
        grid_spec=pltpu.PrefetchScalarGridSpec(
            num_scalar_prefetch=0,
            grid=(n_pad // tile,),
            in_specs=[pl.BlockSpec((tile, c), lambda i: (i, 0)),
                      pl.BlockSpec((c, 1), lambda i: (0, 0))],
            out_specs=pl.BlockSpec((tile, 1), lambda i: (i, 0)),
        ),
        compiler_params=pltpu.CompilerParams(dimension_semantics=("parallel",)),
    )(x_p.astype(jnp.float32), w.astype(jnp.float32))
    return out[:n]


# ---------------------------------------------------------------------------
# Kernel 1b: node_score = tanh(adjacency @ support + b)
#   adjacency streamed in pipelined row tiles (native dtype, e.g. bf16); support resident.
# ---------------------------------------------------------------------------
def _gcn_score_kernel(support_ref, b_ref, adj_ref, out_ref):
    adj = adj_ref[...].astype(jnp.float32)                       # bf16 stream -> f32 compute
    s = jnp.dot(adj, support_ref[...], preferred_element_type=jnp.float32)
    out_ref[...] = jnp.tanh(s + b_ref[0])                        # bias scalar from SMEM


def gcn_score(support, bias, adjacency, *, tile_rows=None, vmem_limit_bytes=None):
    n = adjacency.shape[0]
    itemsize = jnp.dtype(adjacency.dtype).itemsize
    if vmem_limit_bytes is None:
        vmem_limit_bytes = _default_vmem_limit_bytes()
    if tile_rows is None:
        tile_rows = _pick_tile_rows(n, itemsize, vmem_limit_bytes)
    tile = max(8, (tile_rows // 8) * 8)
    tile = min(tile, _round_up(n, 8))
    n_pad = pl.cdiv(n, tile) * tile
    adj_p = adjacency if n_pad == n else jnp.pad(adjacency, ((0, n_pad - n), (0, 0)))
    # TODO(synk): for very large N (tile rows * N bytes too big for VMEM) a 2-D column-tiled
    # reduction grid (accumulate adj_tile @ support_tile, "arbitrary" last axis) would be needed.
    out = pl.pallas_call(
        _gcn_score_kernel,
        out_shape=jax.ShapeDtypeStruct((n_pad, 1), jnp.float32),
        grid_spec=pltpu.PrefetchScalarGridSpec(
            num_scalar_prefetch=0,
            grid=(n_pad // tile,),
            in_specs=[
                pl.BlockSpec((n, 1), lambda i: (0, 0)),                  # support (resident)
                pl.BlockSpec(memory_space=pltpu.MemorySpace.SMEM),       # bias scalar in SMEM
                pl.BlockSpec((tile, n), lambda i: (i, 0)),               # adjacency row tile
            ],
            out_specs=pl.BlockSpec((tile, 1), lambda i: (i, 0)),
        ),
        compiler_params=pltpu.CompilerParams(
            dimension_semantics=("parallel",),
            vmem_limit_bytes=int(vmem_limit_bytes),
        ),
    )(support.astype(jnp.float32), bias.reshape(1).astype(jnp.float32), adj_p)
    return out[:n]


# ---------------------------------------------------------------------------
# Kernel 2: index-driven gathers (scalar-prefetched kept indices drive the BlockSpec
#   index_map; one kept row per grid step, blocks carry full rows -> lane-dense stores).
# ---------------------------------------------------------------------------
def _pool_gather_kernel(idx_ref, x_ref, s_ref, adj_ref, xk_ref, adjk_ref):
    del idx_ref
    xk_ref[...] = x_ref[...] * s_ref[...]                        # X[idx] * node_score[idx]
    adjk_ref[...] = adj_ref[...].astype(adjk_ref.dtype)          # adjacency[idx, :]


def pool_gather(x, node_score, adjacency, kept_idx):
    n, c = x.shape
    k = int(kept_idx.shape[0])
    x3 = x.reshape(n, 1, c).astype(jnp.float32)
    s3 = node_score.reshape(n, 1, 1).astype(jnp.float32)
    adj3 = adjacency.reshape(n, 1, n)
    idx = jnp.asarray(kept_idx, jnp.int32)
    mask_x3, adj_rows3 = pl.pallas_call(
        _pool_gather_kernel,
        out_shape=(jax.ShapeDtypeStruct((k, 1, c), jnp.float32),
                   jax.ShapeDtypeStruct((k, 1, n), jnp.float32)),
        grid_spec=pltpu.PrefetchScalarGridSpec(
            num_scalar_prefetch=1,
            grid=(k,),
            in_specs=[
                pl.BlockSpec((1, 1, c), lambda i, idx_ref: (idx_ref[i], 0, 0)),
                pl.BlockSpec((1, 1, 1), lambda i, idx_ref: (idx_ref[i], 0, 0)),
                pl.BlockSpec((1, 1, n), lambda i, idx_ref: (idx_ref[i], 0, 0)),
            ],
            out_specs=(
                pl.BlockSpec((1, 1, c), lambda i, idx_ref: (i, 0, 0)),
                pl.BlockSpec((1, 1, n), lambda i, idx_ref: (i, 0, 0)),
            ),
        ),
        compiler_params=pltpu.CompilerParams(dimension_semantics=("arbitrary",)),
    )(idx, x3, s3, adj3)
    return mask_x3.reshape(k, c), adj_rows3.reshape(k, n)


def _row_gather_kernel(idx_ref, m_ref, o_ref):
    del idx_ref
    o_ref[...] = m_ref[...]


def row_gather(mat, kept_idx):
    """out[i, :] = mat[kept_idx[i], :] via scalar-prefetch data-dependent block indices."""
    r, w = mat.shape
    k = int(kept_idx.shape[0])
    mat3 = mat.reshape(r, 1, w)
    out = pl.pallas_call(
        _row_gather_kernel,
        out_shape=jax.ShapeDtypeStruct((k, 1, w), mat.dtype),
        grid_spec=pltpu.PrefetchScalarGridSpec(
            num_scalar_prefetch=1,
            grid=(k,),
            in_specs=[pl.BlockSpec((1, 1, w), lambda i, idx_ref: (idx_ref[i], 0, 0))],
            out_specs=pl.BlockSpec((1, 1, w), lambda i, idx_ref: (i, 0, 0)),
        ),
        compiler_params=pltpu.CompilerParams(dimension_semantics=("arbitrary",)),
    )(jnp.asarray(kept_idx, jnp.int32), mat3)
    return out.reshape(k, w)


# ---------------------------------------------------------------------------
# topk: per-graph top int(keep_ratio * n_g) nodes, kept in node order — on device.
# ---------------------------------------------------------------------------
def topk_node_indices(node_score, graph_batch_host, keep_ratio):
    # TODO(synk): the per-graph kept counts are data-dependent shapes; graph membership is
    # treated as static host metadata (needed for static output shapes), while the actual
    # score-dependent selection runs on device (lax.top_k), so node_score never syncs to host.
    scores = node_score.reshape(-1)
    batch = np.asarray(graph_batch_host).reshape(-1)
    kept_parts = []
    for g in np.unique(batch):
        idx = np.nonzero(batch == g)[0].astype(np.int32)
        keep_num = int(keep_ratio * len(idx))
        if keep_num <= 0:
            continue
        seg = jnp.take(scores, jnp.asarray(idx))        # static-index gather, no host sync
        _, local = lax.top_k(seg, keep_num)             # ties: lower index first
        kept_parts.append(jnp.sort(jnp.asarray(idx)[local]))
    if not kept_parts:
        return jnp.zeros((0,), jnp.int32)
    return jnp.concatenate(kept_parts).astype(jnp.int32)


# ---------------------------------------------------------------------------
# Full SelfAttentionPooling forward
# ---------------------------------------------------------------------------
def self_attention_pooling_forward(params, x, adjacency, graph_batch, keep_ratio,
                                   *, graph_batch_host=None):
    n, c = x.shape
    support = compute_support(x, params["W"])                       # kernel 1a
    node_score = gcn_score(support, params["b"], adjacency)         # kernel 1b
    if graph_batch_host is None:
        graph_batch_host = np.asarray(jax.device_get(graph_batch))  # structural metadata only
    kept_idx = topk_node_indices(node_score, graph_batch_host, keep_ratio)
    k = int(kept_idx.shape[0])
    if k == 0:                                                       # guard empty kept set
        return (jnp.zeros((0, c), jnp.float32), jnp.zeros((0, 0), jnp.float32),
                jnp.zeros((0,), graph_batch.dtype))
    mask_x, adj_rows = pool_gather(x, node_score, adjacency, kept_idx)   # kernel 2 (rows)
    # column selection = second row gather on the small [K, N] slab (one transpose of K*N)
    mask_adjacency = row_gather(adj_rows.T, kept_idx).T
    # TODO(synk): filter_adjacency is not defined in the provided spec; implemented as
    # adjacency[mask][:, mask] (sub-adjacency of kept nodes), without renormalization.
    mask_graph_batch = jnp.take(graph_batch, kept_idx)
    return mask_x, mask_adjacency, mask_graph_batch


def init_params(key, input_dim):
    kw, _ = jax.random.split(key, 2)
    std = float(np.sqrt(2.0 / input_dim))                            # kaiming-normal-ish init
    return {"W": std * jax.random.normal(kw, (input_dim, 1), jnp.float32),
            "b": jnp.zeros((1,), jnp.float32)}                       # zeros like the reference


if __name__ == "__main__":
    NUM_GRAPHS, NODES_PER_GRAPH, INPUT_DIM, KEEP_RATIO = 2, 8, 4, 0.5
    N = NUM_GRAPHS * NODES_PER_GRAPH

    key = jax.random.PRNGKey(0)
    k_x, k_a, k_p = jax.random.split(key, 3)

    x = jax.random.normal(k_x, (N, INPUT_DIM), jnp.float32)
    graph_batch = jnp.repeat(jnp.arange(NUM_GRAPHS, dtype=jnp.int32), NODES_PER_GRAPH)

    # block-diagonal (per-graph) symmetric 0/1 adjacency with self loops, stored in bf16
    # (exact for 0/1 values; halves the dominant HBM stream of the score kernel).
    same_graph = graph_batch[:, None] == graph_batch[None, :]
    rnd = jax.random.bernoulli(k_a, 0.3, (N, N))
    adjacency = jnp.where(same_graph & (rnd | rnd.T | jnp.eye(N, dtype=bool)),
                          1.0, 0.0).astype(jnp.bfloat16)

    params = init_params(k_p, INPUT_DIM)

    mask_x, mask_adj, mask_batch = self_attention_pooling_forward(
        params, x, adjacency, graph_batch, KEEP_RATIO)
    jax.block_until_ready((mask_x, mask_adj, mask_batch))

    # ---- light correctness check against a pure-JAX / numpy reference ----
    adj_f32 = adjacency.astype(jnp.float32)
    score_ref = jnp.tanh(adj_f32 @ (x @ params["W"]) + params["b"])
    scores_np = np.asarray(score_ref).reshape(-1)
    batch_np = np.asarray(graph_batch).reshape(-1)
    kept = []
    for g in np.unique(batch_np):
        idx = np.nonzero(batch_np == g)[0]
        keep_num = int(KEEP_RATIO * len(idx))
        order = np.argsort(-scores_np[idx], kind="stable")
        kept.append(np.sort(idx[order[:keep_num]]))
    kept = np.concatenate(kept).astype(np.int32)

    x_expect = np.asarray(x)[kept] * scores_np[kept][:, None]
    adj_expect = np.asarray(adj_f32)[kept][:, kept]
    batch_expect = batch_np[kept]

    K = NUM_GRAPHS * int(KEEP_RATIO * NODES_PER_GRAPH)
    assert mask_x.shape == (K, INPUT_DIM)
    assert mask_adj.shape == (K, K)
    assert mask_batch.shape == (K,)
    assert np.allclose(np.asarray(mask_x), x_expect, atol=1e-3, rtol=1e-3)
    assert np.allclose(np.asarray(mask_adj), adj_expect, atol=1e-3, rtol=1e-3)
    assert np.array_equal(np.asarray(mask_batch), batch_expect)

    print("KERNEL_OK")
</pallas_src>

<mosaic_0001>
module attributes {stable_mosaic.version = 11 : i64} {
  func.func @_support_kernel(%arg0: i32, %arg1: memref<16x4xf32, #tpu.memory_space<vmem>>, %arg2: memref<4x1xf32, #tpu.memory_space<vmem>>, %arg3: memref<16x1xf32, #tpu.memory_space<vmem>>) attributes {dimension_semantics = [#tpu.dimension_semantics<parallel>], iteration_bounds = array<i64: 1>, scalar_prefetch = 0 : i64, scratch_operands = 0 : i64, tpu.core_type = #tpu.core_type<tc>, window_params = [{transform_indices = @transform_0, window_bounds = array<i64: 16, 4>}, {pipeline_mode = #tpu.pipeline_mode<synchronous>, transform_indices = @transform_1, window_bounds = array<i64: 4, 1>}, {transform_indices = @transform_2, window_bounds = array<i64: 16, 1>}]} {
    %c0 = arith.constant 0 : index
    %c0_0 = arith.constant 0 : index
    %0 = vector.load %arg1[%c0, %c0_0] : memref<16x4xf32, #tpu.memory_space<vmem>>, vector<16x4xf32>
    %c0_1 = arith.constant 0 : index
    %c0_2 = arith.constant 0 : index
    %1 = vector.load %arg2[%c0_1, %c0_2] : memref<4x1xf32, #tpu.memory_space<vmem>>, vector<4x1xf32>
    %cst = arith.constant dense<0.000000e+00> : vector<16x1xf32>
    %2 = tpu.matmul %0, %1, %cst {dimension_numbers = #tpu.dot_dimension_numbers<[1], [0], [0], [1], [0, 0, 1, 1], [], []>} : vector<16x4xf32>, vector<4x1xf32>, vector<16x1xf32> -> vector<16x1xf32>
    %c0_3 = arith.constant 0 : index
    %c0_4 = arith.constant 0 : index
    %3 = vector.load %arg3[%c0_3, %c0_4] : memref<16x1xf32, #tpu.memory_space<vmem>>, vector<16x1xf32>
    tpu.vector_store %arg3[%c0_3, %c0_4], %2 {strides = array<i32>} : memref<16x1xf32, #tpu.memory_space<vmem>>, vector<16x1xf32>,
    return
  }
  func.func @transform_0(%arg0: i32) -> (i32, i32) {
    %c0_i32 = arith.constant 0 : i32
    %c0_i32_0 = arith.constant 0 : i32
    return %arg0, %c0_i32 : i32, i32
  }
  func.func @transform_1(%arg0: i32) -> (i32, i32) {
    %c0_i32 = arith.constant 0 : i32
    %c0_i32_0 = arith.constant 0 : i32
    %c0_i32_1 = arith.constant 0 : i32
    return %c0_i32, %c0_i32_0 : i32, i32
  }
  func.func @transform_2(%arg0: i32) -> (i32, i32) {
    %c0_i32 = arith.constant 0 : i32
    %c0_i32_0 = arith.constant 0 : i32
    return %arg0, %c0_i32 : i32, i32
  }
}

</mosaic_0001>

<llo_original>
// kernel: tpu_custom_call.1
$region0: #{tpu_custom_call.1}
  #allocation0 [shape = 'u32[]', space=smem, size = 0x4, offset = 0x4, fixed_abs, tag = 'smem constant byte address 0x4 - core index']
  #allocation1 [shape = 'u32[144,128]{1,0:T(1,128)}', space=vmem, size = 0x12000, scoped, tag = 'internal scratch']
  %s0 = inlined_call_operand.vmem [shape: f32[16,4], index: 0, kind: input, shape index: {}]
  %s1 = inlined_call_operand.vmem [shape: f32[4,1], index: 1, kind: input, shape index: {}]
  %s2 = inlined_call_operand.vmem [shape: f32[16,1], index: 2, kind: output, shape index: {}]
  %s3 = sld [smem:[#allocation0]]
  $region18: #{tpu_custom_call.1} parent=0
    _
  %s5 = ssub.s32 1, %s3
  %s6 = scalar_select 0, %s5, %s3
  // Predicated region
  $region2: #{tpu_custom_call.1} parent=0 // pred_check
    _
  $region3: #{tpu_custom_call.1} parent=0 // pred_check_branch
    %8 = sbr.rel (0) target = $region5
  $region4: #{tpu_custom_call.1} parent=0 // pred_region
    _
  $region5: #{tpu_custom_call.1} parent=0 // pred_fallthru
    _
  // Predicated region
  $region6: #{tpu_custom_call.1} parent=0 // pred_check
    _
  $region7: #{tpu_custom_call.1} parent=0 // pred_check_branch
    %10 = sbr.rel (0) target = $region9
  $region8: #{tpu_custom_call.1} parent=0 // pred_region
    _
  $region9: #{tpu_custom_call.1} parent=0 // pred_fallthru
    _
  %v11 = vld [vmem:[%s0] sm:$0xff]
  %v12 = vld [vmem:[%s0 + $0x8] sm:$0xff]
  %v13 = vld [vmem:[%s1] sm:$0xf]
  %vm14 = vcmask 31744
  %v16 = vsel %vm14, %v11, 0
  %v19 = vsel %vm14, %v12, 0
  %vm21 = vcmask 1043456
  %v23 = vsel %vm21, %v13, 0
  %25 = vmatprep.subr.mxu0 0.0
  %26 = vmatpush1.msra.mxu0 %v23
  %27 = vmatprep.subr.mxu0 0.0
  %28 = vmatpush1.msra.mxu0 0.0
  %29 = vmatprep.subr.mxu0 0.0
  %30 = vmatpush1.msra.mxu0 0.0
  %31 = vmatprep.subr.mxu0 0.0
  %32 = vmatpush1.msra.mxu0 0.0
  %33 = vmatprep.subr.mxu0 0.0
  %34 = vmatpush1.msra.mxu0 0.0
  %35 = vmatprep.subr.mxu0 0.0
  %36 = vmatpush1.msra.mxu0 0.0
  %37 = vmatprep.subr.mxu0 0.0
  %38 = vmatpush1.msra.mxu0 0.0
  %39 = vmatprep.subr.mxu0 0.0
  %40 = vmatpush1.msra.mxu0 0.0
  %41 = vmatprep.subr.mxu0 0.0
  %42 = vmatpush1.msra.mxu0 0.0
  %43 = vmatprep.subr.mxu0 0.0
  %44 = vmatpush1.msra.mxu0 0.0
  %45 = vmatprep.subr.mxu0 0.0
  %46 = vmatpush1.msra.mxu0 0.0
  %47 = vmatprep.subr.mxu0 0.0
  %48 = vmatpush1.msra.mxu0 0.0
  %49 = vmatprep.subr.mxu0 0.0
  %50 = vmatpush1.msra.mxu0 0.0
  %51 = vmatprep.subr.mxu0 0.0
  %52 = vmatpush1.msra.mxu0 0.0
  %53 = vmatprep.subr.mxu0 0.0
  %54 = vmatpush1.msra.mxu0 0.0
  %55 = vmatprep.subr.mxu0 0.0
  %56 = vmatpush1.msra.mxu0 0.0
  %57 = vmatprep.subr.mxu0 0.0
  %58 = vmatpush1.msra.mxu0 0.0
  %59 = vmatprep.subr.mxu0 0.0
  %60 = vmatpush1.msra.mxu0 0.0
  %61 = vmatprep.subr.mxu0 0.0
  %62 = vmatpush1.msra.mxu0 0.0
  %63 = vmatprep.subr.mxu0 0.0
  %64 = vmatpush1.msra.mxu0 0.0
  %65 = vmatprep.subr.mxu0 0.0
  %66 = vmatpush1.msra.mxu0 0.0
  %67 = vmatprep.subr.mxu0 0.0
  %68 = vmatpush1.msra.mxu0 0.0
  %69 = vmatprep.subr.mxu0 0.0
  %70 = vmatpush1.msra.mxu0 0.0
  %71 = vmatprep.subr.mxu0 0.0
  %72 = vmatpush1.msra.mxu0 0.0
  %73 = vmatprep.subr.mxu0 0.0
  %74 = vmatpush1.msra.mxu0 0.0
  %75 = vmatprep.subr.mxu0 0.0
  %76 = vmatpush1.msra.mxu0 0.0
  %77 = vmatprep.subr.mxu0 0.0
  %78 = vmatpush1.msra.mxu0 0.0
  %79 = vmatprep.subr.mxu0 0.0
  %80 = vmatpush1.msra.mxu0 0.0
  %81 = vmatprep.subr.mxu0 0.0
  %82 = vmatpush1.msra.mxu0 0.0
  %83 = vmatprep.subr.mxu0 0.0
  %84 = vmatpush1.msra.mxu0 0.0
  %85 = vmatprep.subr.mxu0 0.0
  %86 = vmatpush1.msra.mxu0 0.0
  %87 = vmatprep.subr.mxu0 0.0
  %88 = vmatpush1.msra.mxu0 0.0
  %89 = vmatprep.mubr.f32.mxu0 0.0
  %90 = vmatmul.mubr.f32.gmra.mrb[0].mxu0 %v16
  %v91 = vpop.f32.mrb[0].mxu0
  %v92 = vadd.f32 0.0, %v91
  %v93 = vpop.f32.mrb[0].mxu0
  %94 = vmatprep.mubr.f32.mxu0 0.0
  %95 = vmatmul.mubr.f32.gmra.mrb[0].mxu0 %v19
  %v96 = vpop.f32.mrb[0].mxu0
  %v97 = vadd.f32 0.0, %v96
  %v98 = vpop.f32.mrb[0].mxu0
  %99 = vdwg.mxu0
  %vm100 = vcmask 7168
  %101 = vst.msk [vmem:[%s2] sm:$0xff] %vm100, %v92
  %102 = vst.msk [vmem:[%s2 + $0x8] sm:$0xff] %vm100, %v97
  // Predicated region
  $region10: #{tpu_custom_call.1} parent=0 // pred_check
    _
  $region11: #{tpu_custom_call.1} parent=0 // pred_check_branch
    %104 = sbr.rel (0) target = $region13
  $region12: #{tpu_custom_call.1} parent=0 // pred_region
    _
  $region13: #{tpu_custom_call.1} parent=0 // pred_fallthru
    _
  // Predicated region
  $region14: #{tpu_custom_call.1} parent=0 // pred_check
    _
  $region15: #{tpu_custom_call.1} parent=0 // pred_check_branch
    %106 = sbr.rel (0) target = $region17
  $region16: #{tpu_custom_call.1} parent=0 // pred_region
    _
  $region17: #{tpu_custom_call.1} parent=0 // pred_fallthru
    _

</llo_original>
